<compile_context>
chip_gen: v7x
topology: tpu7x:2x2x1
jax: 0.10.0
libtpu: 0.0.40
codegen_flags: <defaults>
</compile_context>

<pallas_src>
import functools

import jax
import jax.numpy as jnp
from jax.experimental import pallas as pl
from jax.experimental.pallas import tpu as pltpu

EPS = 1e-6
# Whole-slab byte threshold (B*C*H*W*4) under which the fully fused single-kernel
# path is used (x resident in VMEM, one HBM read + one HBM write).
_FUSED_BYTES_LIMIT = 4 * 1024 * 1024


# ---------------------------------------------------------------------------
# Fused path: ONE pallas_call (stats -> domain average -> derangement ->
# lambda mix -> affine apply).  All glue runs on tiny (C,1) vectors in-kernel.
# ---------------------------------------------------------------------------
def _fused_kernel(lam_ref, x_ref, o_ref, *, D, Bd, perm, eps):
    B = D * Bd
    n = float(x_ref.shape[2])                            # H*W (static)

    # pass 1: per-sample channel stats, single pass (sum & sum-of-squares).
    # NOTE: sum-of-squares form has f32 cancellation risk only if |mean| >> std.
    mus, sigs = [], []
    for b in range(B):                                   # static unroll (B tiny)
        xb = x_ref[b]                                    # (C, HW)
        s1 = jnp.sum(xb, axis=1, keepdims=True)          # (C, 1)
        s2 = jnp.sum(xb * xb, axis=1, keepdims=True)     # (C, 1)
        mu = s1 / n
        var = (s2 - n * mu * mu) / (n - 1.0)             # unbiased (torch.var default)
        mus.append(mu)
        sigs.append(jnp.sqrt(var + eps))

    # per-domain averaged style (the "new_statistics" / broadcast style)
    mu_d = [sum(mus[d * Bd:(d + 1) * Bd]) / float(Bd) for d in range(D)]
    sig_d = [sum(sigs[d * Bd:(d + 1) * Bd]) / float(Bd) for d in range(D)]

    # pass 2: normalize + re-style folded into one per-channel affine:
    #   out = x * scale + bias,  scale = mix_sig / sig,  bias = mix_mu - mu * scale
    for b in range(B):
        d = b // Bd
        p = perm[d]                                      # derangement (static)
        l = lam_ref[b]                                   # (1, 1) Beta(0.1,0.1) sample
        mix_mu = mu_d[d] * l + mu_d[p] * (1.0 - l)
        mix_sig = sig_d[d] * l + sig_d[p] * (1.0 - l)
        scale = mix_sig / sig_d[d]                       # (C, 1)
        bias = mix_mu - mu_d[d] * scale                  # (C, 1)
        o_ref[b] = x_ref[b] * scale + bias               # (C, HW) FMA, lane-broadcast


def _forward_fused(x, lmda, perm, D, Bd):
    B, C, H, W = x.shape
    HW = H * W
    x3 = x.reshape(B, C, HW).astype(jnp.float32)
    lam = lmda.reshape(B, 1, 1).astype(jnp.float32)
    kernel = functools.partial(_fused_kernel, D=D, Bd=Bd, perm=perm, eps=EPS)
    out = pl.pallas_call(
        kernel,
        out_shape=jax.ShapeDtypeStruct((B, C, HW), jnp.float32),
        grid_spec=pltpu.PrefetchScalarGridSpec(
            num_scalar_prefetch=0,
            grid=(1,),
            in_specs=[pl.BlockSpec((B, 1, 1), lambda i: (0, 0, 0)),
                      pl.BlockSpec((B, C, HW), lambda i: (0, 0, 0))],
            out_specs=pl.BlockSpec((B, C, HW), lambda i: (0, 0, 0))),
        compiler_params=pltpu.CompilerParams(
            dimension_semantics=("arbitrary",)),
    )(lam, x3)
    return out.reshape(B, C, H, W)


# ---------------------------------------------------------------------------
# Tiled fallback path (large slabs): stats kernel + affine apply kernel,
# tiny domain/lambda glue in (jitted) JAX between them.
# ---------------------------------------------------------------------------
def _stats_kernel(x_ref, st_ref, *, eps):
    x = x_ref[...]                                       # (TR, HW)
    n = float(x.shape[1])
    s1 = jnp.sum(x, axis=1, keepdims=True)               # single pass over the tile
    s2 = jnp.sum(x * x, axis=1, keepdims=True)
    mu = s1 / n
    var = (s2 - n * mu * mu) / (n - 1.0)                 # unbiased
    st_ref[:, 0:1] = mu                                  # packed (TR, 2) output
    st_ref[:, 1:2] = jnp.sqrt(var + eps)


def _apply_kernel(x_ref, sb_ref, o_ref):
    sb = sb_ref[...]                                     # (TR, 2): col0=scale, col1=bias
    o_ref[...] = x_ref[...] * sb[:, 0:1] + sb[:, 1:2]    # one FMA per element


def _row_tile(bc, hw, target_bytes=2 << 20):
    """Largest row tile that divides bc, is sublane-aligned, and keeps a ~2 MiB block.

    Prefers >=2 grid steps so both v7x TensorCores get work; block + double
    buffering stays well under the 32 MiB scoped VMEM default on every gen.
    """
    if bc % 8 != 0:
        return bc                      # full-slab block (block == array dims is legal)
    cands = [t for t in range(8, bc + 1, 8)
             if bc % t == 0 and t * hw * 4 <= target_bytes]
    if not cands:
        return 8
    multi = [t for t in cands if bc // t >= 2]
    return max(multi) if multi else max(cands)


def _forward_tiled(x, lmda, perm, D, Bd):
    B, C, H, W = x.shape
    HW = H * W
    BC = B * C
    x2 = x.reshape(BC, HW).astype(jnp.float32)
    TR = _row_tile(BC, HW)
    grid = (pl.cdiv(BC, TR),)

    # --- per-(batch, channel) spatial stats, packed as (BC, 2) = [mu, sig] ---
    st = pl.pallas_call(
        functools.partial(_stats_kernel, eps=EPS),
        out_shape=jax.ShapeDtypeStruct((BC, 2), jnp.float32),
        grid_spec=pltpu.PrefetchScalarGridSpec(
            num_scalar_prefetch=0,
            grid=grid,
            in_specs=[pl.BlockSpec((TR, HW), lambda i: (i, 0))],
            out_specs=pl.BlockSpec((TR, 2), lambda i: (i, 0))),
        compiler_params=pltpu.CompilerParams(dimension_semantics=("parallel",)),
    )(x2)

    mu = st[:, 0].reshape(B, C)
    sig = st[:, 1].reshape(B, C)

    # --- tiny glue: domain averaging, derangement, lambda mixing, affine fold ---
    mu_d = jnp.mean(mu.reshape(D, Bd, C), axis=1)        # (D, C)
    sig_d = jnp.mean(sig.reshape(D, Bd, C), axis=1)
    pidx = list(perm)                                    # static derangement
    mu_rep = jnp.repeat(mu_d, Bd, axis=0)                # style[0]  (B, C)
    sig_rep = jnp.repeat(sig_d, Bd, axis=0)              # style[1]
    mu2 = jnp.repeat(mu_d[pidx, :], Bd, axis=0)          # style2[0]
    sig2 = jnp.repeat(sig_d[pidx, :], Bd, axis=0)        # style2[1]

    l = lmda.reshape(B, 1).astype(jnp.float32)
    mix_mu = mu_rep * l + mu2 * (1.0 - l)
    mix_sig = sig_rep * l + sig2 * (1.0 - l)
    # fold normalize + restyle into one per-row affine (no per-element divide)
    scale = mix_sig / sig_rep
    bias = mix_mu - mu_rep * scale
    sb = jnp.stack([scale.reshape(BC), bias.reshape(BC)], axis=1)   # (BC, 2)

    # --- elementwise affine over the full (BC, HW) slab ---
    out = pl.pallas_call(
        _apply_kernel,
        out_shape=jax.ShapeDtypeStruct((BC, HW), jnp.float32),
        grid_spec=pltpu.PrefetchScalarGridSpec(
            num_scalar_prefetch=0,
            grid=grid,
            in_specs=[pl.BlockSpec((TR, HW), lambda i: (i, 0)),
                      pl.BlockSpec((TR, 2), lambda i: (i, 0))],
            out_specs=pl.BlockSpec((TR, HW), lambda i: (i, 0))),
        compiler_params=pltpu.CompilerParams(dimension_semantics=("parallel",)),
    )(x2, sb)
    return out.reshape(B, C, H, W)


# ---------------------------------------------------------------------------
# Public wrapper
# ---------------------------------------------------------------------------
def _style_mixer_forward(x, lmda, perm, domain_n, *, force_tiled=False):
    """x: (B,C,H,W) f32 NCHW. lmda: (B,) Beta(0.1,0.1). perm: static derangement tuple."""
    B, C, H, W = x.shape
    D = int(domain_n)
    assert B % D == 0, "batch must be evenly split across domains"
    assert H * W > 1, "unbiased variance needs H*W > 1"
    assert len(perm) == D
    Bd = B // D
    slab_bytes = B * C * H * W * 4
    if (not force_tiled) and slab_bytes <= _FUSED_BYTES_LIMIT:
        return _forward_fused(x, lmda, tuple(perm), D, Bd)
    return _forward_tiled(x, lmda, tuple(perm), D, Bd)


style_mixer_forward = jax.jit(
    _style_mixer_forward,
    static_argnums=(2, 3),                 # perm (tuple), domain_n
    static_argnames=("force_tiled",))


# ----- pure-JAX reference (mirrors the PyTorch forward for this config) -----
def _reference(x, lmda, perm, D):
    B, C, H, W = x.shape
    Bd = B // D
    mu = x.mean(axis=(2, 3), keepdims=True)
    var = x.var(axis=(2, 3), keepdims=True, ddof=1)
    sig = jnp.sqrt(var + EPS)
    stats = jnp.stack([mu, sig]).reshape(2, D, Bd, C, 1, 1).mean(axis=2, keepdims=True)
    mu_r = jnp.repeat(stats[0], Bd, axis=1).reshape(B, C, 1, 1)
    sig_r = jnp.repeat(stats[1], Bd, axis=1).reshape(B, C, 1, 1)
    xn = (x - mu_r) / sig_r
    pidx = jnp.asarray(perm)
    mu2 = mu_r.reshape(D, Bd, C, 1, 1)[pidx].reshape(B, C, 1, 1)
    sig2 = sig_r.reshape(D, Bd, C, 1, 1)[pidx].reshape(B, C, 1, 1)
    l = lmda.reshape(B, 1, 1, 1)
    mmu = mu_r * l + mu2 * (1 - l)
    msig = sig_r * l + sig2 * (1 - l)
    return xn * msig + mmu


if __name__ == "__main__":
    key = jax.random.PRNGKey(0)
    kx, kl = jax.random.split(key)

    domain_n_ctor = 3              # module __init__ arg
    D = domain_n_ctor - 1          # self.domain_n
    B, C, H, W = 6, 8, 16, 16
    num_features = C

    x = jax.random.normal(kx, (B, C, H, W), dtype=jnp.float32)

    # forward()'s randomness, drawn deterministically in-script:
    lmda = jax.random.beta(kl, 0.1, 0.1, (B,)).astype(jnp.float32)  # Beta sample (traced)
    perm = (1, 0)   # host-side randperm derangement of arange(2), kept static like torch

    # module buffer from __init__ (unused since hparams['nvs1'] is False)
    statistics = jnp.zeros((2, D, 1, num_features, 1, 1), jnp.float32)
    # TODO(synk): Fourier ('F') / AdaptiveAug / gumbel-softmax / EMA-buffer branches
    #             are not exercised in this config and are not implemented.

    ref = _reference(x, lmda, perm, D)

    out_fused = jax.block_until_ready(style_mixer_forward(x, lmda, perm, D))
    out_tiled = jax.block_until_ready(
        style_mixer_forward(x, lmda, perm, D, force_tiled=True))

    assert out_fused.shape == (B, C, H, W)
    assert jnp.allclose(out_fused, ref, atol=1e-4, rtol=1e-4)
    assert jnp.allclose(out_tiled, ref, atol=1e-4, rtol=1e-4)
    print("KERNEL_OK")
</pallas_src>

<mosaic_0001>
module attributes {stable_mosaic.version = 11 : i64} {
  func.func @_fused_kernel(%arg0: i32, %arg1: memref<6x1x1xf32, #tpu.memory_space<vmem>>, %arg2: memref<6x8x256xf32, #tpu.memory_space<vmem>>, %arg3: memref<6x8x256xf32, #tpu.memory_space<vmem>>) attributes {dimension_semantics = [#tpu.dimension_semantics<arbitrary>], iteration_bounds = array<i64: 1>, scalar_prefetch = 0 : i64, scratch_operands = 0 : i64, tpu.core_type = #tpu.core_type<tc>, window_params = [{pipeline_mode = #tpu.pipeline_mode<synchronous>, transform_indices = @transform_0, window_bounds = array<i64: 6, 1, 1>}, {pipeline_mode = #tpu.pipeline_mode<synchronous>, transform_indices = @transform_1, window_bounds = array<i64: 6, 8, 256>}, {pipeline_mode = #tpu.pipeline_mode<synchronous>, transform_indices = @transform_2, window_bounds = array<i64: 6, 8, 256>}]} {
    %c0 = arith.constant 0 : index
    %c0_0 = arith.constant 0 : index
    %c0_1 = arith.constant 0 : index
    %0 = vector.load %arg2[%c0, %c0_0, %c0_1] : memref<6x8x256xf32, #tpu.memory_space<vmem>>, vector<1x8x256xf32>
    %1 = vector.shape_cast %0 : vector<1x8x256xf32> to vector<8x256xf32>
    %cst = arith.constant dense<0.000000e+00> : vector<8xf32>
    %2 = vector.multi_reduction <add>, %1, %cst [1] : vector<8x256xf32> to vector<8xf32>
    %3 = vector.shape_cast %2 : vector<8xf32> to vector<8x1xf32>
    %4 = arith.mulf %1, %1 : vector<8x256xf32>
    %cst_2 = arith.constant dense<0.000000e+00> : vector<8xf32>
    %5 = vector.multi_reduction <add>, %4, %cst_2 [1] : vector<8x256xf32> to vector<8xf32>
    %6 = vector.shape_cast %5 : vector<8xf32> to vector<8x1xf32>
    %cst_3 = arith.constant 2.560000e+02 : f32
    %7 = vector.broadcast %cst_3 : f32 to vector<8x1xf32>
    %8 = arith.divf %3, %7 : vector<8x1xf32>
    %cst_4 = arith.constant 2.560000e+02 : f32
    %9 = vector.broadcast %cst_4 : f32 to vector<8x1xf32>
    %10 = arith.mulf %9, %8 : vector<8x1xf32>
    %11 = arith.mulf %10, %8 : vector<8x1xf32>
    %12 = arith.subf %6, %11 : vector<8x1xf32>
    %cst_5 = arith.constant 2.550000e+02 : f32
    %13 = vector.broadcast %cst_5 : f32 to vector<8x1xf32>
    %14 = arith.divf %12, %13 : vector<8x1xf32>
    %cst_6 = arith.constant 9.99999997E-7 : f32
    %15 = vector.broadcast %cst_6 : f32 to vector<8x1xf32>
    %16 = arith.addf %14, %15 : vector<8x1xf32>
    %17 = math.sqrt %16 : vector<8x1xf32>
    %c1 = arith.constant 1 : index
    %c0_7 = arith.constant 0 : index
    %c0_8 = arith.constant 0 : index
    %18 = vector.load %arg2[%c1, %c0_7, %c0_8] : memref<6x8x256xf32, #tpu.memory_space<vmem>>, vector<1x8x256xf32>
    %19 = vector.shape_cast %18 : vector<1x8x256xf32> to vector<8x256xf32>
    %cst_9 = arith.constant dense<0.000000e+00> : vector<8xf32>
    %20 = vector.multi_reduction <add>, %19, %cst_9 [1] : vector<8x256xf32> to vector<8xf32>
    %21 = vector.shape_cast %20 : vector<8xf32> to vector<8x1xf32>
    %22 = arith.mulf %19, %19 : vector<8x256xf32>
    %cst_10 = arith.constant dense<0.000000e+00> : vector<8xf32>
    %23 = vector.multi_reduction <add>, %22, %cst_10 [1] : vector<8x256xf32> to vector<8xf32>
    %24 = vector.shape_cast %23 : vector<8xf32> to vector<8x1xf32>
    %cst_11 = arith.constant 2.560000e+02 : f32
    %25 = vector.broadcast %cst_11 : f32 to vector<8x1xf32>
    %26 = arith.divf %21, %25 : vector<8x1xf32>
    %cst_12 = arith.constant 2.560000e+02 : f32
    %27 = vector.broadcast %cst_12 : f32 to vector<8x1xf32>
    %28 = arith.mulf %27, %26 : vector<8x1xf32>
    %29 = arith.mulf %28, %26 : vector<8x1xf32>
    %30 = arith.subf %24, %29 : vector<8x1xf32>
    %cst_13 = arith.constant 2.550000e+02 : f32
    %31 = vector.broadcast %cst_13 : f32 to vector<8x1xf32>
    %32 = arith.divf %30, %31 : vector<8x1xf32>
    %cst_14 = arith.constant 9.99999997E-7 : f32
    %33 = vector.broadcast %cst_14 : f32 to vector<8x1xf32>
    %34 = arith.addf %32, %33 : vector<8x1xf32>
    %35 = math.sqrt %34 : vector<8x1xf32>
    %c2 = arith.constant 2 : index
    %c0_15 = arith.constant 0 : index
    %c0_16 = arith.constant 0 : index
    %36 = vector.load %arg2[%c2, %c0_15, %c0_16] : memref<6x8x256xf32, #tpu.memory_space<vmem>>, vector<1x8x256xf32>
    %37 = vector.shape_cast %36 : vector<1x8x256xf32> to vector<8x256xf32>
    %cst_17 = arith.constant dense<0.000000e+00> : vector<8xf32>
    %38 = vector.multi_reduction <add>, %37, %cst_17 [1] : vector<8x256xf32> to vector<8xf32>
    %39 = vector.shape_cast %38 : vector<8xf32> to vector<8x1xf32>
    %40 = arith.mulf %37, %37 : vector<8x256xf32>
    %cst_18 = arith.constant dense<0.000000e+00> : vector<8xf32>
    %41 = vector.multi_reduction <add>, %40, %cst_18 [1] : vector<8x256xf32> to vector<8xf32>
    %42 = vector.shape_cast %41 : vector<8xf32> to vector<8x1xf32>
    %cst_19 = arith.constant 2.560000e+02 : f32
    %43 = vector.broadcast %cst_19 : f32 to vector<8x1xf32>
    %44 = arith.divf %39, %43 : vector<8x1xf32>
    %cst_20 = arith.constant 2.560000e+02 : f32
    %45 = vector.broadcast %cst_20 : f32 to vector<8x1xf32>
    %46 = arith.mulf %45, %44 : vector<8x1xf32>
    %47 = arith.mulf %46, %44 : vector<8x1xf32>
    %48 = arith.subf %42, %47 : vector<8x1xf32>
    %cst_21 = arith.constant 2.550000e+02 : f32
    %49 = vector.broadcast %cst_21 : f32 to vector<8x1xf32>
    %50 = arith.divf %48, %49 : vector<8x1xf32>
    %cst_22 = arith.constant 9.99999997E-7 : f32
    %51 = vector.broadcast %cst_22 : f32 to vector<8x1xf32>
    %52 = arith.addf %50, %51 : vector<8x1xf32>
    %53 = math.sqrt %52 : vector<8x1xf32>
    %c3 = arith.constant 3 : index
    %c0_23 = arith.constant 0 : index
    %c0_24 = arith.constant 0 : index
    %54 = vector.load %arg2[%c3, %c0_23, %c0_24] : memref<6x8x256xf32, #tpu.memory_space<vmem>>, vector<1x8x256xf32>
    %55 = vector.shape_cast %54 : vector<1x8x256xf32> to vector<8x256xf32>
    %cst_25 = arith.constant dense<0.000000e+00> : vector<8xf32>
    %56 = vector.multi_reduction <add>, %55, %cst_25 [1] : vector<8x256xf32> to vector<8xf32>
    %57 = vector.shape_cast %56 : vector<8xf32> to vector<8x1xf32>
    %58 = arith.mulf %55, %55 : vector<8x256xf32>
    %cst_26 = arith.constant dense<0.000000e+00> : vector<8xf32>
    %59 = vector.multi_reduction <add>, %58, %cst_26 [1] : vector<8x256xf32> to vector<8xf32>
    %60 = vector.shape_cast %59 : vector<8xf32> to vector<8x1xf32>
    %cst_27 = arith.constant 2.560000e+02 : f32
    %61 = vector.broadcast %cst_27 : f32 to vector<8x1xf32>
    %62 = arith.divf %57, %61 : vector<8x1xf32>
    %cst_28 = arith.constant 2.560000e+02 : f32
    %63 = vector.broadcast %cst_28 : f32 to vector<8x1xf32>
    %64 = arith.mulf %63, %62 : vector<8x1xf32>
    %65 = arith.mulf %64, %62 : vector<8x1xf32>
    %66 = arith.subf %60, %65 : vector<8x1xf32>
    %cst_29 = arith.constant 2.550000e+02 : f32
    %67 = vector.broadcast %cst_29 : f32 to vector<8x1xf32>
    %68 = arith.divf %66, %67 : vector<8x1xf32>
    %cst_30 = arith.constant 9.99999997E-7 : f32
    %69 = vector.broadcast %cst_30 : f32 to vector<8x1xf32>
    %70 = arith.addf %68, %69 : vector<8x1xf32>
    %71 = math.sqrt %70 : vector<8x1xf32>
    %c4 = arith.constant 4 : index
    %c0_31 = arith.constant 0 : index
    %c0_32 = arith.constant 0 : index
    %72 = vector.load %arg2[%c4, %c0_31, %c0_32] : memref<6x8x256xf32, #tpu.memory_space<vmem>>, vector<1x8x256xf32>
    %73 = vector.shape_cast %72 : vector<1x8x256xf32> to vector<8x256xf32>
    %cst_33 = arith.constant dense<0.000000e+00> : vector<8xf32>
    %74 = vector.multi_reduction <add>, %73, %cst_33 [1] : vector<8x256xf32> to vector<8xf32>
    %75 = vector.shape_cast %74 : vector<8xf32> to vector<8x1xf32>
    %76 = arith.mulf %73, %73 : vector<8x256xf32>
    %cst_34 = arith.constant dense<0.000000e+00> : vector<8xf32>
    %77 = vector.multi_reduction <add>, %76, %cst_34 [1] : vector<8x256xf32> to vector<8xf32>
    %78 = vector.shape_cast %77 : vector<8xf32> to vector<8x1xf32>
    %cst_35 = arith.constant 2.560000e+02 : f32
    %79 = vector.broadcast %cst_35 : f32 to vector<8x1xf32>
    %80 = arith.divf %75, %79 : vector<8x1xf32>
    %cst_36 = arith.constant 2.560000e+02 : f32
    %81 = vector.broadcast %cst_36 : f32 to vector<8x1xf32>
    %82 = arith.mulf %81, %80 : vector<8x1xf32>
    %83 = arith.mulf %82, %80 : vector<8x1xf32>
    %84 = arith.subf %78, %83 : vector<8x1xf32>
    %cst_37 = arith.constant 2.550000e+02 : f32
    %85 = vector.broadcast %cst_37 : f32 to vector<8x1xf32>
    %86 = arith.divf %84, %85 : vector<8x1xf32>
    %cst_38 = arith.constant 9.99999997E-7 : f32
    %87 = vector.broadcast %cst_38 : f32 to vector<8x1xf32>
    %88 = arith.addf %86, %87 : vector<8x1xf32>
    %89 = math.sqrt %88 : vector<8x1xf32>
    %c5 = arith.constant 5 : index
    %c0_39 = arith.constant 0 : index
    %c0_40 = arith.constant 0 : index
    %90 = vector.load %arg2[%c5, %c0_39, %c0_40] : memref<6x8x256xf32, #tpu.memory_space<vmem>>, vector<1x8x256xf32>
    %91 = vector.shape_cast %90 : vector<1x8x256xf32> to vector<8x256xf32>
    %cst_41 = arith.constant dense<0.000000e+00> : vector<8xf32>
    %92 = vector.multi_reduction <add>, %91, %cst_41 [1] : vector<8x256xf32> to vector<8xf32>
    %93 = vector.shape_cast %92 : vector<8xf32> to vector<8x1xf32>
    %94 = arith.mulf %91, %91 : vector<8x256xf32>
    %cst_42 = arith.constant dense<0.000000e+00> : vector<8xf32>
    %95 = vector.multi_reduction <add>, %94, %cst_42 [1] : vector<8x256xf32> to vector<8xf32>
    %96 = vector.shape_cast %95 : vector<8xf32> to vector<8x1xf32>
    %cst_43 = arith.constant 2.560000e+02 : f32
    %97 = vector.broadcast %cst_43 : f32 to vector<8x1xf32>
    %98 = arith.divf %93, %97 : vector<8x1xf32>
    %cst_44 = arith.constant 2.560000e+02 : f32
    %99 = vector.broadcast %cst_44 : f32 to vector<8x1xf32>
    %100 = arith.mulf %99, %98 : vector<8x1xf32>
    %101 = arith.mulf %100, %98 : vector<8x1xf32>
    %102 = arith.subf %96, %101 : vector<8x1xf32>
    %cst_45 = arith.constant 2.550000e+02 : f32
    %103 = vector.broadcast %cst_45 : f32 to vector<8x1xf32>
    %104 = arith.divf %102, %103 : vector<8x1xf32>
    %cst_46 = arith.constant 9.99999997E-7 : f32
    %105 = vector.broadcast %cst_46 : f32 to vector<8x1xf32>
    %106 = arith.addf %104, %105 : vector<8x1xf32>
    %107 = math.sqrt %106 : vector<8x1xf32>
    %cst_47 = arith.constant 0.000000e+00 : f32
    %108 = vector.broadcast %cst_47 : f32 to vector<8x1xf32>
    %109 = arith.addf %108, %8 : vector<8x1xf32>
    %110 = arith.addf %109, %26 : vector<8x1xf32>
    %111 = arith.addf %110, %44 : vector<8x1xf32>
    %cst_48 = arith.constant 3.000000e+00 : f32
    %112 = vector.broadcast %cst_48 : f32 to vector<8x1xf32>
    %113 = arith.divf %111, %112 : vector<8x1xf32>
    %cst_49 = arith.constant 0.000000e+00 : f32
    %114 = vector.broadcast %cst_49 : f32 to vector<8x1xf32>
    %115 = arith.addf %114, %62 : vector<8x1xf32>
    %116 = arith.addf %115, %80 : vector<8x1xf32>
    %117 = arith.addf %116, %98 : vector<8x1xf32>
    %cst_50 = arith.constant 3.000000e+00 : f32
    %118 = vector.broadcast %cst_50 : f32 to vector<8x1xf32>
    %119 = arith.divf %117, %118 : vector<8x1xf32>
    %cst_51 = arith.constant 0.000000e+00 : f32
    %120 = vector.broadcast %cst_51 : f32 to vector<8x1xf32>
    %121 = arith.addf %120, %17 : vector<8x1xf32>
    %122 = arith.addf %121, %35 : vector<8x1xf32>
    %123 = arith.addf %122, %53 : vector<8x1xf32>
    %cst_52 = arith.constant 3.000000e+00 : f32
    %124 = vector.broadcast %cst_52 : f32 to vector<8x1xf32>
    %125 = arith.divf %123, %124 : vector<8x1xf32>
    %cst_53 = arith.constant 0.000000e+00 : f32
    %126 = vector.broadcast %cst_53 : f32 to vector<8x1xf32>
    %127 = arith.addf %126, %71 : vector<8x1xf32>
    %128 = arith.addf %127, %89 : vector<8x1xf32>
    %129 = arith.addf %128, %107 : vector<8x1xf32>
    %cst_54 = arith.constant 3.000000e+00 : f32
    %130 = vector.broadcast %cst_54 : f32 to vector<8x1xf32>
    %131 = arith.divf %129, %130 : vector<8x1xf32>
    %c0_55 = arith.constant 0 : index
    %c0_56 = arith.constant 0 : index
    %c0_57 = arith.constant 0 : index
    %132 = vector.load %arg1[%c0_55, %c0_56, %c0_57] : memref<6x1x1xf32, #tpu.memory_space<vmem>>, vector<1x1x1xf32>
    %133 = vector.shape_cast %132 : vector<1x1x1xf32> to vector<1x1xf32>
    %134 = vector.broadcast %133 : vector<1x1xf32> to vector<8x1xf32>
    %135 = arith.mulf %113, %134 : vector<8x1xf32>
    %cst_58 = arith.constant 1.000000e+00 : f32
    %136 = vector.broadcast %cst_58 : f32 to vector<1x1xf32>
    %137 = arith.subf %136, %133 : vector<1x1xf32>
    %138 = vector.broadcast %137 : vector<1x1xf32> to vector<8x1xf32>
    %139 = arith.mulf %119, %138 : vector<8x1xf32>
    %140 = arith.addf %135, %139 : vector<8x1xf32>
    %141 = vector.broadcast %133 : vector<1x1xf32> to vector<8x1xf32>
    %142 = arith.mulf %125, %141 : vector<8x1xf32>
    %cst_59 = arith.constant 1.000000e+00 : f32
    %143 = vector.broadcast %cst_59 : f32 to vector<1x1xf32>
    %144 = arith.subf %143, %133 : vector<1x1xf32>
    %145 = vector.broadcast %144 : vector<1x1xf32> to vector<8x1xf32>
    %146 = arith.mulf %131, %145 : vector<8x1xf32>
    %147 = arith.addf %142, %146 : vector<8x1xf32>
    %148 = arith.divf %147, %125 : vector<8x1xf32>
    %149 = arith.mulf %113, %148 : vector<8x1xf32>
    %150 = arith.subf %140, %149 : vector<8x1xf32>
    %c0_60 = arith.constant 0 : index
    %c0_61 = arith.constant 0 : index
    %c0_62 = arith.constant 0 : index
    %151 = vector.load %arg2[%c0_60, %c0_61, %c0_62] : memref<6x8x256xf32, #tpu.memory_space<vmem>>, vector<1x8x256xf32>
    %152 = vector.shape_cast %151 : vector<1x8x256xf32> to vector<8x256xf32>
    %153 = vector.broadcast %148 : vector<8x1xf32> to vector<8x256xf32>
    %154 = arith.mulf %152, %153 : vector<8x256xf32>
    %155 = vector.broadcast %150 : vector<8x1xf32> to vector<8x256xf32>
    %156 = arith.addf %154, %155 : vector<8x256xf32>
    %c0_63 = arith.constant 0 : index
    %c0_64 = arith.constant 0 : index
    %c0_65 = arith.constant 0 : index
    %157 = vector.load %arg3[%c0_63, %c0_64, %c0_65] : memref<6x8x256xf32, #tpu.memory_space<vmem>>, vector<1x8x256xf32>
    %158 = vector.shape_cast %157 : vector<1x8x256xf32> to vector<8x256xf32>
    %159 = vector.shape_cast %156 : vector<8x256xf32> to vector<1x8x256xf32>
    tpu.vector_store %arg3[%c0_63, %c0_64, %c0_65], %159 {strides = array<i32>} : memref<6x8x256xf32, #tpu.memory_space<vmem>>, vector<1x8x256xf32>,
    %c1_66 = arith.constant 1 : index
    %c0_67 = arith.constant 0 : index
    %c0_68 = arith.constant 0 : index
    %160 = vector.load %arg1[%c1_66, %c0_67, %c0_68] : memref<6x1x1xf32, #tpu.memory_space<vmem>>, vector<1x1x1xf32>
    %161 = vector.shape_cast %160 : vector<1x1x1xf32> to vector<1x1xf32>
    %162 = vector.broadcast %161 : vector<1x1xf32> to vector<8x1xf32>
    %163 = arith.mulf %113, %162 : vector<8x1xf32>
    %cst_69 = arith.constant 1.000000e+00 : f32
    %164 = vector.broadcast %cst_69 : f32 to vector<1x1xf32>
    %165 = arith.subf %164, %161 : vector<1x1xf32>
    %166 = vector.broadcast %165 : vector<1x1xf32> to vector<8x1xf32>
    %167 = arith.mulf %119, %166 : vector<8x1xf32>
    %168 = arith.addf %163, %167 : vector<8x1xf32>
    %169 = vector.broadcast %161 : vector<1x1xf32> to vector<8x1xf32>
    %170 = arith.mulf %125, %169 : vector<8x1xf32>
    %cst_70 = arith.constant 1.000000e+00 : f32
    %171 = vector.broadcast %cst_70 : f32 to vector<1x1xf32>
    %172 = arith.subf %171, %161 : vector<1x1xf32>
    %173 = vector.broadcast %172 : vector<1x1xf32> to vector<8x1xf32>
    %174 = arith.mulf %131, %173 : vector<8x1xf32>
    %175 = arith.addf %170, %174 : vector<8x1xf32>
    %176 = arith.divf %175, %125 : vector<8x1xf32>
    %177 = arith.mulf %113, %176 : vector<8x1xf32>
    %178 = arith.subf %168, %177 : vector<8x1xf32>
    %c1_71 = arith.constant 1 : index
    %c0_72 = arith.constant 0 : index
    %c0_73 = arith.constant 0 : index
    %179 = vector.load %arg2[%c1_71, %c0_72, %c0_73] : memref<6x8x256xf32, #tpu.memory_space<vmem>>, vector<1x8x256xf32>
    %180 = vector.shape_cast %179 : vector<1x8x256xf32> to vector<8x256xf32>
    %181 = vector.broadcast %176 : vector<8x1xf32> to vector<8x256xf32>
    %182 = arith.mulf %180, %181 : vector<8x256xf32>
    %183 = vector.broadcast %178 : vector<8x1xf32> to vector<8x256xf32>
    %184 = arith.addf %182, %183 : vector<8x256xf32>
    %c1_74 = arith.constant 1 : index
    %c0_75 = arith.constant 0 : index
    %c0_76 = arith.constant 0 : index
    %185 = vector.load %arg3[%c1_74, %c0_75, %c0_76] : memref<6x8x256xf32, #tpu.memory_space<vmem>>, vector<1x8x256xf32>
    %186 = vector.shape_cast %185 : vector<1x8x256xf32> to vector<8x256xf32>
    %187 = vector.shape_cast %184 : vector<8x256xf32> to vector<1x8x256xf32>
    tpu.vector_store %arg3[%c1_74, %c0_75, %c0_76], %187 {strides = array<i32>} : memref<6x8x256xf32, #tpu.memory_space<vmem>>, vector<1x8x256xf32>,
    %c2_77 = arith.constant 2 : index
    %c0_78 = arith.constant 0 : index
    %c0_79 = arith.constant 0 : index
    %188 = vector.load %arg1[%c2_77, %c0_78, %c0_79] : memref<6x1x1xf32, #tpu.memory_space<vmem>>, vector<1x1x1xf32>
    %189 = vector.shape_cast %188 : vector<1x1x1xf32> to vector<1x1xf32>
    %190 = vector.broadcast %189 : vector<1x1xf32> to vector<8x1xf32>
    %191 = arith.mulf %113, %190 : vector<8x1xf32>
    %cst_80 = arith.constant 1.000000e+00 : f32
    %192 = vector.broadcast %cst_80 : f32 to vector<1x1xf32>
    %193 = arith.subf %192, %189 : vector<1x1xf32>
    %194 = vector.broadcast %193 : vector<1x1xf32> to vector<8x1xf32>
    %195 = arith.mulf %119, %194 : vector<8x1xf32>
    %196 = arith.addf %191, %195 : vector<8x1xf32>
    %197 = vector.broadcast %189 : vector<1x1xf32> to vector<8x1xf32>
    %198 = arith.mulf %125, %197 : vector<8x1xf32>
    %cst_81 = arith.constant 1.000000e+00 : f32
    %199 = vector.broadcast %cst_81 : f32 to vector<1x1xf32>
    %200 = arith.subf %199, %189 : vector<1x1xf32>
    %201 = vector.broadcast %200 : vector<1x1xf32> to vector<8x1xf32>
    %202 = arith.mulf %131, %201 : vector<8x1xf32>
    %203 = arith.addf %198, %202 : vector<8x1xf32>
    %204 = arith.divf %203, %125 : vector<8x1xf32>
    %205 = arith.mulf %113, %204 : vector<8x1xf32>
    %206 = arith.subf %196, %205 : vector<8x1xf32>
    %c2_82 = arith.constant 2 : index
    %c0_83 = arith.constant 0 : index
    %c0_84 = arith.constant 0 : index
    %207 = vector.load %arg2[%c2_82, %c0_83, %c0_84] : memref<6x8x256xf32, #tpu.memory_space<vmem>>, vector<1x8x256xf32>
    %208 = vector.shape_cast %207 : vector<1x8x256xf32> to vector<8x256xf32>
    %209 = vector.broadcast %204 : vector<8x1xf32> to vector<8x256xf32>
    %210 = arith.mulf %208, %209 : vector<8x256xf32>
    %211 = vector.broadcast %206 : vector<8x1xf32> to vector<8x256xf32>
    %212 = arith.addf %210, %211 : vector<8x256xf32>
    %c2_85 = arith.constant 2 : index
    %c0_86 = arith.constant 0 : index
    %c0_87 = arith.constant 0 : index
    %213 = vector.load %arg3[%c2_85, %c0_86, %c0_87] : memref<6x8x256xf32, #tpu.memory_space<vmem>>, vector<1x8x256xf32>
    %214 = vector.shape_cast %213 : vector<1x8x256xf32> to vector<8x256xf32>
    %215 = vector.shape_cast %212 : vector<8x256xf32> to vector<1x8x256xf32>
    tpu.vector_store %arg3[%c2_85, %c0_86, %c0_87], %215 {strides = array<i32>} : memref<6x8x256xf32, #tpu.memory_space<vmem>>, vector<1x8x256xf32>,
    %c3_88 = arith.constant 3 : index
    %c0_89 = arith.constant 0 : index
    %c0_90 = arith.constant 0 : index
    %216 = vector.load %arg1[%c3_88, %c0_89, %c0_90] : memref<6x1x1xf32, #tpu.memory_space<vmem>>, vector<1x1x1xf32>
    %217 = vector.shape_cast %216 : vector<1x1x1xf32> to vector<1x1xf32>
    %218 = vector.broadcast %217 : vector<1x1xf32> to vector<8x1xf32>
    %219 = arith.mulf %119, %218 : vector<8x1xf32>
    %cst_91 = arith.constant 1.000000e+00 : f32
    %220 = vector.broadcast %cst_91 : f32 to vector<1x1xf32>
    %221 = arith.subf %220, %217 : vector<1x1xf32>
    %222 = vector.broadcast %221 : vector<1x1xf32> to vector<8x1xf32>
    %223 = arith.mulf %113, %222 : vector<8x1xf32>
    %224 = arith.addf %219, %223 : vector<8x1xf32>
    %225 = vector.broadcast %217 : vector<1x1xf32> to vector<8x1xf32>
    %226 = arith.mulf %131, %225 : vector<8x1xf32>
    %cst_92 = arith.constant 1.000000e+00 : f32
    %227 = vector.broadcast %cst_92 : f32 to vector<1x1xf32>
    %228 = arith.subf %227, %217 : vector<1x1xf32>
    %229 = vector.broadcast %228 : vector<1x1xf32> to vector<8x1xf32>
    %230 = arith.mulf %125, %229 : vector<8x1xf32>
    %231 = arith.addf %226, %230 : vector<8x1xf32>
    %232 = arith.divf %231, %131 : vector<8x1xf32>
    %233 = arith.mulf %119, %232 : vector<8x1xf32>
    %234 = arith.subf %224, %233 : vector<8x1xf32>
    %c3_93 = arith.constant 3 : index
    %c0_94 = arith.constant 0 : index
    %c0_95 = arith.constant 0 : index
    %235 = vector.load %arg2[%c3_93, %c0_94, %c0_95] : memref<6x8x256xf32, #tpu.memory_space<vmem>>, vector<1x8x256xf32>
    %236 = vector.shape_cast %235 : vector<1x8x256xf32> to vector<8x256xf32>
    %237 = vector.broadcast %232 : vector<8x1xf32> to vector<8x256xf32>
    %238 = arith.mulf %236, %237 : vector<8x256xf32>
    %239 = vector.broadcast %234 : vector<8x1xf32> to vector<8x256xf32>
    %240 = arith.addf %238, %239 : vector<8x256xf32>
    %c3_96 = arith.constant 3 : index
    %c0_97 = arith.constant 0 : index
    %c0_98 = arith.constant 0 : index
    %241 = vector.load %arg3[%c3_96, %c0_97, %c0_98] : memref<6x8x256xf32, #tpu.memory_space<vmem>>, vector<1x8x256xf32>
    %242 = vector.shape_cast %241 : vector<1x8x256xf32> to vector<8x256xf32>
    %243 = vector.shape_cast %240 : vector<8x256xf32> to vector<1x8x256xf32>
    tpu.vector_store %arg3[%c3_96, %c0_97, %c0_98], %243 {strides = array<i32>} : memref<6x8x256xf32, #tpu.memory_space<vmem>>, vector<1x8x256xf32>,
    %c4_99 = arith.constant 4 : index
    %c0_100 = arith.constant 0 : index
    %c0_101 = arith.constant 0 : index
    %244 = vector.load %arg1[%c4_99, %c0_100, %c0_101] : memref<6x1x1xf32, #tpu.memory_space<vmem>>, vector<1x1x1xf32>
    %245 = vector.shape_cast %244 : vector<1x1x1xf32> to vector<1x1xf32>
    %246 = vector.broadcast %245 : vector<1x1xf32> to vector<8x1xf32>
    %247 = arith.mulf %119, %246 : vector<8x1xf32>
    %cst_102 = arith.constant 1.000000e+00 : f32
    %248 = vector.broadcast %cst_102 : f32 to vector<1x1xf32>
    %249 = arith.subf %248, %245 : vector<1x1xf32>
    %250 = vector.broadcast %249 : vector<1x1xf32> to vector<8x1xf32>
    %251 = arith.mulf %113, %250 : vector<8x1xf32>
    %252 = arith.addf %247, %251 : vector<8x1xf32>
    %253 = vector.broadcast %245 : vector<1x1xf32> to vector<8x1xf32>
    %254 = arith.mulf %131, %253 : vector<8x1xf32>
    %cst_103 = arith.constant 1.000000e+00 : f32
    %255 = vector.broadcast %cst_103 : f32 to vector<1x1xf32>
    %256 = arith.subf %255, %245 : vector<1x1xf32>
    %257 = vector.broadcast %256 : vector<1x1xf32> to vector<8x1xf32>
    %258 = arith.mulf %125, %257 : vector<8x1xf32>
    %259 = arith.addf %254, %258 : vector<8x1xf32>
    %260 = arith.divf %259, %131 : vector<8x1xf32>
    %261 = arith.mulf %119, %260 : vector<8x1xf32>
    %262 = arith.subf %252, %261 : vector<8x1xf32>
    %c4_104 = arith.constant 4 : index
    %c0_105 = arith.constant 0 : index
    %c0_106 = arith.constant 0 : index
    %263 = vector.load %arg2[%c4_104, %c0_105, %c0_106] : memref<6x8x256xf32, #tpu.memory_space<vmem>>, vector<1x8x256xf32>
    %264 = vector.shape_cast %263 : vector<1x8x256xf32> to vector<8x256xf32>
    %265 = vector.broadcast %260 : vector<8x1xf32> to vector<8x256xf32>
    %266 = arith.mulf %264, %265 : vector<8x256xf32>
    %267 = vector.broadcast %262 : vector<8x1xf32> to vector<8x256xf32>
    %268 = arith.addf %266, %267 : vector<8x256xf32>
    %c4_107 = arith.constant 4 : index
    %c0_108 = arith.constant 0 : index
    %c0_109 = arith.constant 0 : index
    %269 = vector.load %arg3[%c4_107, %c0_108, %c0_109] : memref<6x8x256xf32, #tpu.memory_space<vmem>>, vector<1x8x256xf32>
    %270 = vector.shape_cast %269 : vector<1x8x256xf32> to vector<8x256xf32>
    %271 = vector.shape_cast %268 : vector<8x256xf32> to vector<1x8x256xf32>
    tpu.vector_store %arg3[%c4_107, %c0_108, %c0_109], %271 {strides = array<i32>} : memref<6x8x256xf32, #tpu.memory_space<vmem>>, vector<1x8x256xf32>,
    %c5_110 = arith.constant 5 : index
    %c0_111 = arith.constant 0 : index
    %c0_112 = arith.constant 0 : index
    %272 = vector.load %arg1[%c5_110, %c0_111, %c0_112] : memref<6x1x1xf32, #tpu.memory_space<vmem>>, vector<1x1x1xf32>
    %273 = vector.shape_cast %272 : vector<1x1x1xf32> to vector<1x1xf32>
    %274 = vector.broadcast %273 : vector<1x1xf32> to vector<8x1xf32>
    %275 = arith.mulf %119, %274 : vector<8x1xf32>
    %cst_113 = arith.constant 1.000000e+00 : f32
    %276 = vector.broadcast %cst_113 : f32 to vector<1x1xf32>
    %277 = arith.subf %276, %273 : vector<1x1xf32>
    %278 = vector.broadcast %277 : vector<1x1xf32> to vector<8x1xf32>
    %279 = arith.mulf %113, %278 : vector<8x1xf32>
    %280 = arith.addf %275, %279 : vector<8x1xf32>
    %281 = vector.broadcast %273 : vector<1x1xf32> to vector<8x1xf32>
    %282 = arith.mulf %131, %281 : vector<8x1xf32>
    %cst_114 = arith.constant 1.000000e+00 : f32
    %283 = vector.broadcast %cst_114 : f32 to vector<1x1xf32>
    %284 = arith.subf %283, %273 : vector<1x1xf32>
    %285 = vector.broadcast %284 : vector<1x1xf32> to vector<8x1xf32>
    %286 = arith.mulf %125, %285 : vector<8x1xf32>
    %287 = arith.addf %282, %286 : vector<8x1xf32>
    %288 = arith.divf %287, %131 : vector<8x1xf32>
    %289 = arith.mulf %119, %288 : vector<8x1xf32>
    %290 = arith.subf %280, %289 : vector<8x1xf32>
    %c5_115 = arith.constant 5 : index
    %c0_116 = arith.constant 0 : index
    %c0_117 = arith.constant 0 : index
    %291 = vector.load %arg2[%c5_115, %c0_116, %c0_117] : memref<6x8x256xf32, #tpu.memory_space<vmem>>, vector<1x8x256xf32>
    %292 = vector.shape_cast %291 : vector<1x8x256xf32> to vector<8x256xf32>
    %293 = vector.broadcast %288 : vector<8x1xf32> to vector<8x256xf32>
    %294 = arith.mulf %292, %293 : vector<8x256xf32>
    %295 = vector.broadcast %290 : vector<8x1xf32> to vector<8x256xf32>
    %296 = arith.addf %294, %295 : vector<8x256xf32>
    %c5_118 = arith.constant 5 : index
    %c0_119 = arith.constant 0 : index
    %c0_120 = arith.constant 0 : index
    %297 = vector.load %arg3[%c5_118, %c0_119, %c0_120] : memref<6x8x256xf32, #tpu.memory_space<vmem>>, vector<1x8x256xf32>
    %298 = vector.shape_cast %297 : vector<1x8x256xf32> to vector<8x256xf32>
    %299 = vector.shape_cast %296 : vector<8x256xf32> to vector<1x8x256xf32>
    tpu.vector_store %arg3[%c5_118, %c0_119, %c0_120], %299 {strides = array<i32>} : memref<6x8x256xf32, #tpu.memory_space<vmem>>, vector<1x8x256xf32>,
    return
  }
  func.func @transform_0(%arg0: i32) -> (i32, i32, i32) {
    %c0_i32 = arith.constant 0 : i32
    %c0_i32_0 = arith.constant 0 : i32
    %c0_i32_1 = arith.constant 0 : i32
    %c0_i32_2 = arith.constant 0 : i32
    return %c0_i32, %c0_i32_0, %c0_i32_1 : i32, i32, i32
  }
  func.func @transform_1(%arg0: i32) -> (i32, i32, i32) {
    %c0_i32 = arith.constant 0 : i32
    %c0_i32_0 = arith.constant 0 : i32
    %c0_i32_1 = arith.constant 0 : i32
    %c0_i32_2 = arith.constant 0 : i32
    return %c0_i32, %c0_i32_0, %c0_i32_1 : i32, i32, i32
  }
  func.func @transform_2(%arg0: i32) -> (i32, i32, i32) {
    %c0_i32 = arith.constant 0 : i32
    %c0_i32_0 = arith.constant 0 : i32
    %c0_i32_1 = arith.constant 0 : i32
    %c0_i32_2 = arith.constant 0 : i32
    return %c0_i32, %c0_i32_0, %c0_i32_1 : i32, i32, i32
  }
}

</mosaic_0001>

<llo_original>
// kernel: _style_mixer_forward.1
$region0: #{_style_mixer_forward.1}
  #allocation0 [shape = 'u32[]', space=smem, size = 0x4, offset = 0x4, fixed_abs, tag = 'smem constant byte address 0x4 - core index']
  #allocation1 [shape = 'u32[144,128]{1,0:T(1,128)}', space=vmem, size = 0x12000, scoped, tag = 'internal scratch']
  %s0 = inlined_call_operand.vmem [shape: f32[6,1,1], index: 0, kind: input, shape index: {}]
  %s1 = inlined_call_operand.vmem [shape: f32[6,8,256], index: 1, kind: input, shape index: {}]
  %s2 = inlined_call_operand.vmem [shape: f32[6,8,256], index: 2, kind: output, shape index: {}]
  %s3 = sld [smem:[#allocation0]]
  $region18: #{_style_mixer_forward.1} parent=0
    _
  %s5 = ssub.s32 1, %s3
  %s6 = scalar_select 0, %s5, %s3
  // Predicated region
  $region2: #{_style_mixer_forward.1} parent=0 // pred_check
    _
  $region3: #{_style_mixer_forward.1} parent=0 // pred_check_branch
    %8 = sbr.rel (0) target = $region5
  $region4: #{_style_mixer_forward.1} parent=0 // pred_region
    _
  $region5: #{_style_mixer_forward.1} parent=0 // pred_fallthru
    _
  // Predicated region
  $region6: #{_style_mixer_forward.1} parent=0 // pred_check
    _
  $region7: #{_style_mixer_forward.1} parent=0 // pred_check_branch
    %10 = sbr.rel (0) target = $region9
  $region8: #{_style_mixer_forward.1} parent=0 // pred_region
    _
  $region9: #{_style_mixer_forward.1} parent=0 // pred_fallthru
    _
  %v11 = vld [vmem:[%s1] sm:$0xff]
  %v12 = vld [vmem:[%s1 + $0x8] sm:$0xff]
  %v13 = vadd.f32 %v11, %v12
  %14 = vadd.xlane.f32.xlu0 %v13
  %v15 = vpop.xlane.xlu0 %14
  %v16 = vmul.f32 %v11, %v11
  %v17 = vmul.f32 %v12, %v12
  %v18 = vadd.f32 %v16, %v17
  %19 = vadd.xlane.f32.xlu0 %v18
  %v20 = vpop.xlane.xlu0 %19
  %v21 = vrcp.pop 256.0
  %v22 = vmul.f32 %v15, %v21
  %v23 = vmul.f32 %v22, 256.0
  %v24 = vmul.f32 %v23, %v22
  %v25 = vsub.f32 %v20, %v24
  %v26 = vrcp.pop 255.0
  %v27 = vmul.f32 %v25, %v26
  %v28 = vadd.f32 %v27, 1e-06
  %v29 = vrsqrt.pop %v28
  %v30 = vmul.f32 %v28, %v29
  %vm31 = vcmp.eq.f32.partialorder %v28, inf
  %v32 = vsel %vm31, %v28, %v30
  %vm33 = vcmp.eq.f32.partialorder %v28, 0.0
  %v34 = vand.u32 %v28, 2147483648
  %v35 = vsel %vm33, %v34, %v32
  %s36 = scalar_lea.vmem %s1, 16
  %v37 = vld [vmem:[%s36] sm:$0xff]
  %v38 = vld [vmem:[%s36 + $0x8] sm:$0xff]
  %v39 = vadd.f32 %v37, %v38
  %40 = vadd.xlane.f32.xlu0 %v39
  %v41 = vpop.xlane.xlu0 %40
  %v42 = vmul.f32 %v37, %v37
  %v43 = vmul.f32 %v38, %v38
  %v44 = vadd.f32 %v42, %v43
  %45 = vadd.xlane.f32.xlu0 %v44
  %v46 = vpop.xlane.xlu0 %45
  %v47 = vmul.f32 %v41, %v21
  %v48 = vmul.f32 %v47, 256.0
  %v49 = vmul.f32 %v48, %v47
  %v50 = vsub.f32 %v46, %v49
  %v51 = vmul.f32 %v50, %v26
  %v52 = vadd.f32 %v51, 1e-06
  %v53 = vrsqrt.pop %v52
  %v54 = vmul.f32 %v52, %v53
  %vm55 = vcmp.eq.f32.partialorder %v52, inf
  %v56 = vsel %vm55, %v52, %v54
  %vm57 = vcmp.eq.f32.partialorder %v52, 0.0
  %v58 = vand.u32 %v52, 2147483648
  %v59 = vsel %vm57, %v58, %v56
  %s60 = scalar_lea.vmem %s1, 32
  %v61 = vld [vmem:[%s60] sm:$0xff]
  %v62 = vld [vmem:[%s60 + $0x8] sm:$0xff]
  %v63 = vadd.f32 %v61, %v62
  %64 = vadd.xlane.f32.xlu0 %v63
  %v65 = vpop.xlane.xlu0 %64
  %v66 = vmul.f32 %v61, %v61
  %v67 = vmul.f32 %v62, %v62
  %v68 = vadd.f32 %v66, %v67
  %69 = vadd.xlane.f32.xlu0 %v68
  %v70 = vpop.xlane.xlu0 %69
  %v71 = vmul.f32 %v65, %v21
  %v72 = vmul.f32 %v71, 256.0
  %v73 = vmul.f32 %v72, %v71
  %v74 = vsub.f32 %v70, %v73
  %v75 = vmul.f32 %v74, %v26
  %v76 = vadd.f32 %v75, 1e-06
  %v77 = vrsqrt.pop %v76
  %v78 = vmul.f32 %v76, %v77
  %vm79 = vcmp.eq.f32.partialorder %v76, inf
  %v80 = vsel %vm79, %v76, %v78
  %vm81 = vcmp.eq.f32.partialorder %v76, 0.0
  %v82 = vand.u32 %v76, 2147483648
  %v83 = vsel %vm81, %v82, %v80
  %s84 = scalar_lea.vmem %s1, 48
  %v85 = vld [vmem:[%s84] sm:$0xff]
  %v86 = vld [vmem:[%s84 + $0x8] sm:$0xff]
  %v87 = vadd.f32 %v85, %v86
  %88 = vadd.xlane.f32.xlu0 %v87
  %v89 = vpop.xlane.xlu0 %88
  %v90 = vmul.f32 %v85, %v85
  %v91 = vmul.f32 %v86, %v86
  %v92 = vadd.f32 %v90, %v91
  %93 = vadd.xlane.f32.xlu0 %v92
  %v94 = vpop.xlane.xlu0 %93
  %v95 = vmul.f32 %v89, %v21
  %v96 = vmul.f32 %v95, 256.0
  %v97 = vmul.f32 %v96, %v95
  %v98 = vsub.f32 %v94, %v97
  %v99 = vmul.f32 %v98, %v26
  %v100 = vadd.f32 %v99, 1e-06
  %v101 = vrsqrt.pop %v100
  %v102 = vmul.f32 %v100, %v101
  %vm103 = vcmp.eq.f32.partialorder %v100, inf
  %v104 = vsel %vm103, %v100, %v102
  %vm105 = vcmp.eq.f32.partialorder %v100, 0.0
  %v106 = vand.u32 %v100, 2147483648
  %v107 = vsel %vm105, %v106, %v104
  %s108 = scalar_lea.vmem %s1, 64
  %v109 = vld [vmem:[%s108] sm:$0xff]
  %v110 = vld [vmem:[%s108 + $0x8] sm:$0xff]
  %v111 = vadd.f32 %v109, %v110
  %112 = vadd.xlane.f32.xlu0 %v111
  %v113 = vpop.xlane.xlu0 %112
  %v114 = vmul.f32 %v109, %v109
  %v115 = vmul.f32 %v110, %v110
  %v116 = vadd.f32 %v114, %v115
  %117 = vadd.xlane.f32.xlu0 %v116
  %v118 = vpop.xlane.xlu0 %117
  %v119 = vmul.f32 %v113, %v21
  %v120 = vmul.f32 %v119, 256.0
  %v121 = vmul.f32 %v120, %v119
  %v122 = vsub.f32 %v118, %v121
  %v123 = vmul.f32 %v122, %v26
  %v124 = vadd.f32 %v123, 1e-06
  %v125 = vrsqrt.pop %v124
  %v126 = vmul.f32 %v124, %v125
  %vm127 = vcmp.eq.f32.partialorder %v124, inf
  %v128 = vsel %vm127, %v124, %v126
  %vm129 = vcmp.eq.f32.partialorder %v124, 0.0
  %v130 = vand.u32 %v124, 2147483648
  %v131 = vsel %vm129, %v130, %v128
  %s132 = scalar_lea.vmem %s1, 80
  %v133 = vld [vmem:[%s132] sm:$0xff]
  %v134 = vld [vmem:[%s132 + $0x8] sm:$0xff]
  %v135 = vadd.f32 %v133, %v134
  %136 = vadd.xlane.f32.xlu0 %v135
  %v137 = vpop.xlane.xlu0 %136
  %v138 = vmul.f32 %v133, %v133
  %v139 = vmul.f32 %v134, %v134
  %v140 = vadd.f32 %v138, %v139
  %141 = vadd.xlane.f32.xlu0 %v140
  %v142 = vpop.xlane.xlu0 %141
  %v143 = vmul.f32 %v137, %v21
  %v144 = vmul.f32 %v143, 256.0
  %v145 = vmul.f32 %v144, %v143
  %v146 = vsub.f32 %v142, %v145
  %v147 = vmul.f32 %v146, %v26
  %v148 = vadd.f32 %v147, 1e-06
  %v149 = vrsqrt.pop %v148
  %v150 = vmul.f32 %v148, %v149
  %vm151 = vcmp.eq.f32.partialorder %v148, inf
  %v152 = vsel %vm151, %v148, %v150
  %vm153 = vcmp.eq.f32.partialorder %v148, 0.0
  %v154 = vand.u32 %v148, 2147483648
  %v155 = vsel %vm153, %v154, %v152
  %v156 = vadd.f32 %v22, 0.0
  %v157 = vadd.f32 %v156, %v47
  %v158 = vadd.f32 %v157, %v71
  %v159 = vrcp.pop 3.0
  %v160 = vmul.f32 %v158, %v159
  %v161 = vadd.f32 %v95, 0.0
  %v162 = vadd.f32 %v161, %v119
  %v163 = vadd.f32 %v162, %v143
  %v164 = vmul.f32 %v163, %v159
  %v165 = vadd.f32 %v35, 0.0
  %v166 = vadd.f32 %v165, %v59
  %v167 = vadd.f32 %v166, %v83
  %v168 = vmul.f32 %v167, %v159
  %v169 = vadd.f32 %v107, 0.0
  %v170 = vadd.f32 %v169, %v131
  %v171 = vadd.f32 %v170, %v155
  %v172 = vmul.f32 %v171, %v159
  %v173 = vld [vmem:[%s0] sm:$0x1]
  %v175 = vlaneseq
  %v176 = vshrl.u32 %v175, 7
  %v177 = vsub.s32 0, %v176
  %v178 = vrot.slane %v173, %v177
  %v180 = vmul.f32 %v160, %v178
  %v181 = vsub.f32 1.0, %v173
  %v183 = vlaneseq
  %v184 = vshrl.u32 %v183, 7
  %v185 = vsub.s32 0, %v184
  %v186 = vrot.slane %v181, %v185
  %v188 = vmul.f32 %v164, %v186
  %v189 = vadd.f32 %v180, %v188
  %v190 = vmul.f32 %v168, %v178
  %v191 = vmul.f32 %v172, %v186
  %v192 = vadd.f32 %v190, %v191
  %v193 = vrcp.pop %v168
  %v194 = vmul.f32 %v192, %v193
  %v195 = vmul.f32 %v160, %v194
  %v196 = vsub.f32 %v189, %v195
  %198 = vset.pattern.permute.xlu0 0
  %199 = vperm.xlu0 %198, %v194
  %v200 = vpop.permute.xlu0 %199
  %v202 = vmul.f32 %v11, %v200
  %v203 = vmul.f32 %v12, %v200
  %205 = vset.pattern.permute.xlu0 0
  %206 = vperm.xlu0 %205, %v196
  %v207 = vpop.permute.xlu0 %206
  %v209 = vadd.f32 %v202, %v207
  %v210 = vadd.f32 %v203, %v207
  %211 = vst [vmem:[%s2] sm:$0xff] %v209
  %212 = vst [vmem:[%s2 + $0x8] sm:$0xff] %v210
  %s213 = scalar_lea.vmem %s0, 1
  %v214 = vld [vmem:[%s213] sm:$0x1]
  %v216 = vlaneseq
  %v217 = vshrl.u32 %v216, 7
  %v218 = vsub.s32 0, %v217
  %v219 = vrot.slane %v214, %v218
  %v221 = vmul.f32 %v160, %v219
  %v222 = vsub.f32 1.0, %v214
  %v224 = vlaneseq
  %v225 = vshrl.u32 %v224, 7
  %v226 = vsub.s32 0, %v225
  %v227 = vrot.slane %v222, %v226
  %v229 = vmul.f32 %v164, %v227
  %v230 = vadd.f32 %v221, %v229
  %v231 = vmul.f32 %v168, %v219
  %v232 = vmul.f32 %v172, %v227
  %v233 = vadd.f32 %v231, %v232
  %v234 = vmul.f32 %v233, %v193
  %v235 = vmul.f32 %v160, %v234
  %v236 = vsub.f32 %v230, %v235
  %v237 = vld [vmem:[%s36] sm:$0xff]
  %v238 = vld [vmem:[%s36 + $0x8] sm:$0xff]
  %240 = vset.pattern.permute.xlu0 0
  %241 = vperm.xlu0 %240, %v234
  %v242 = vpop.permute.xlu0 %241
  %v244 = vmul.f32 %v237, %v242
  %v245 = vmul.f32 %v238, %v242
  %247 = vset.pattern.permute.xlu0 0
  %248 = vperm.xlu0 %247, %v236
  %v249 = vpop.permute.xlu0 %248
  %v251 = vadd.f32 %v244, %v249
  %v252 = vadd.f32 %v245, %v249
  %s253 = scalar_lea.vmem %s2, 16
  %254 = vst [vmem:[%s253] sm:$0xff] %v251
  %255 = vst [vmem:[%s253 + $0x8] sm:$0xff] %v252
  %s256 = scalar_lea.vmem %s0, 2
  %v257 = vld [vmem:[%s256] sm:$0x1]
  %v259 = vlaneseq
  %v260 = vshrl.u32 %v259, 7
  %v261 = vsub.s32 0, %v260
  %v262 = vrot.slane %v257, %v261
  %v264 = vmul.f32 %v160, %v262
  %v265 = vsub.f32 1.0, %v257
  %v267 = vlaneseq
  %v268 = vshrl.u32 %v267, 7
  %v269 = vsub.s32 0, %v268
  %v270 = vrot.slane %v265, %v269
  %v272 = vmul.f32 %v164, %v270
  %v273 = vadd.f32 %v264, %v272
  %v274 = vmul.f32 %v168, %v262
  %v275 = vmul.f32 %v172, %v270
  %v276 = vadd.f32 %v274, %v275
  %v277 = vmul.f32 %v276, %v193
  %v278 = vmul.f32 %v160, %v277
  %v279 = vsub.f32 %v273, %v278
  %v280 = vld [vmem:[%s60] sm:$0xff]
  %v281 = vld [vmem:[%s60 + $0x8] sm:$0xff]
  %283 = vset.pattern.permute.xlu0 0
  %284 = vperm.xlu0 %283, %v277
  %v285 = vpop.permute.xlu0 %284
  %v287 = vmul.f32 %v280, %v285
  %v288 = vmul.f32 %v281, %v285
  %290 = vset.pattern.permute.xlu0 0
  %291 = vperm.xlu0 %290, %v279
  %v292 = vpop.permute.xlu0 %291
  %v294 = vadd.f32 %v287, %v292
  %v295 = vadd.f32 %v288, %v292
  %s296 = scalar_lea.vmem %s2, 32
  %297 = vst [vmem:[%s296] sm:$0xff] %v294
  %298 = vst [vmem:[%s296 + $0x8] sm:$0xff] %v295
  %s299 = scalar_lea.vmem %s0, 3
  %v300 = vld [vmem:[%s299] sm:$0x1]
  %v302 = vlaneseq
  %v303 = vshrl.u32 %v302, 7
  %v304 = vsub.s32 0, %v303
  %v305 = vrot.slane %v300, %v304
  %v307 = vmul.f32 %v164, %v305
  %v308 = vsub.f32 1.0, %v300
  %v310 = vlaneseq
  %v311 = vshrl.u32 %v310, 7
  %v312 = vsub.s32 0, %v311
  %v313 = vrot.slane %v308, %v312
  %v315 = vmul.f32 %v160, %v313
  %v316 = vadd.f32 %v307, %v315
  %v317 = vmul.f32 %v172, %v305
  %v318 = vmul.f32 %v168, %v313
  %v319 = vadd.f32 %v317, %v318
  %v320 = vrcp.pop %v172
  %v321 = vmul.f32 %v319, %v320
  %v322 = vmul.f32 %v164, %v321
  %v323 = vsub.f32 %v316, %v322
  %v324 = vld [vmem:[%s84] sm:$0xff]
  %v325 = vld [vmem:[%s84 + $0x8] sm:$0xff]
  %327 = vset.pattern.permute.xlu0 0
  %328 = vperm.xlu0 %327, %v321
  %v329 = vpop.permute.xlu0 %328
  %v331 = vmul.f32 %v324, %v329
  %v332 = vmul.f32 %v325, %v329
  %334 = vset.pattern.permute.xlu0 0
  %335 = vperm.xlu0 %334, %v323
  %v336 = vpop.permute.xlu0 %335
  %v338 = vadd.f32 %v331, %v336
  %v339 = vadd.f32 %v332, %v336
  %s340 = scalar_lea.vmem %s2, 48
  %341 = vst [vmem:[%s340] sm:$0xff] %v338
  %342 = vst [vmem:[%s340 + $0x8] sm:$0xff] %v339
  %s343 = scalar_lea.vmem %s0, 4
  %v344 = vld [vmem:[%s343] sm:$0x1]
  %v346 = vlaneseq
  %v347 = vshrl.u32 %v346, 7
  %v348 = vsub.s32 0, %v347
  %v349 = vrot.slane %v344, %v348
  %v351 = vmul.f32 %v164, %v349
  %v352 = vsub.f32 1.0, %v344
  %v354 = vlaneseq
  %v355 = vshrl.u32 %v354, 7
  %v356 = vsub.s32 0, %v355
  %v357 = vrot.slane %v352, %v356
  %v359 = vmul.f32 %v160, %v357
  %v360 = vadd.f32 %v351, %v359
  %v361 = vmul.f32 %v172, %v349
  %v362 = vmul.f32 %v168, %v357
  %v363 = vadd.f32 %v361, %v362
  %v364 = vmul.f32 %v363, %v320
  %v365 = vmul.f32 %v164, %v364
  %v366 = vsub.f32 %v360, %v365
  %v367 = vld [vmem:[%s108] sm:$0xff]
  %v368 = vld [vmem:[%s108 + $0x8] sm:$0xff]
  %370 = vset.pattern.permute.xlu0 0
  %371 = vperm.xlu0 %370, %v364
  %v372 = vpop.permute.xlu0 %371
  %v374 = vmul.f32 %v367, %v372
  %v375 = vmul.f32 %v368, %v372
  %377 = vset.pattern.permute.xlu0 0
  %378 = vperm.xlu0 %377, %v366
  %v379 = vpop.permute.xlu0 %378
  %v381 = vadd.f32 %v374, %v379
  %v382 = vadd.f32 %v375, %v379
  %s383 = scalar_lea.vmem %s2, 64
  %384 = vst [vmem:[%s383] sm:$0xff] %v381
  %385 = vst [vmem:[%s383 + $0x8] sm:$0xff] %v382
  %s386 = scalar_lea.vmem %s0, 5
  %v387 = vld [vmem:[%s386] sm:$0x1]
  %v389 = vlaneseq
  %v390 = vshrl.u32 %v389, 7
  %v391 = vsub.s32 0, %v390
  %v392 = vrot.slane %v387, %v391
  %v394 = vmul.f32 %v164, %v392
  %v395 = vsub.f32 1.0, %v387
  %v397 = vlaneseq
  %v398 = vshrl.u32 %v397, 7
  %v399 = vsub.s32 0, %v398
  %v400 = vrot.slane %v395, %v399
  %v402 = vmul.f32 %v160, %v400
  %v403 = vadd.f32 %v394, %v402
  %v404 = vmul.f32 %v172, %v392
  %v405 = vmul.f32 %v168, %v400
  %v406 = vadd.f32 %v404, %v405
  %v407 = vmul.f32 %v406, %v320
  %v408 = vmul.f32 %v164, %v407
  %v409 = vsub.f32 %v403, %v408
  %v410 = vld [vmem:[%s132] sm:$0xff]
  %v411 = vld [vmem:[%s132 + $0x8] sm:$0xff]
  %413 = vset.pattern.permute.xlu0 0
  %414 = vperm.xlu0 %413, %v407
  %v415 = vpop.permute.xlu0 %414
  %v417 = vmul.f32 %v410, %v415
  %v418 = vmul.f32 %v411, %v415
  %420 = vset.pattern.permute.xlu0 0
  %421 = vperm.xlu0 %420, %v409
  %v422 = vpop.permute.xlu0 %421
  %v424 = vadd.f32 %v417, %v422
  %v425 = vadd.f32 %v418, %v422
  %s426 = scalar_lea.vmem %s2, 80
  %427 = vst [vmem:[%s426] sm:$0xff] %v424
  %428 = vst [vmem:[%s426 + $0x8] sm:$0xff] %v425
  // Predicated region
  $region10: #{_style_mixer_forward.1} parent=0 // pred_check
    _
  $region11: #{_style_mixer_forward.1} parent=0 // pred_check_branch
    %430 = sbr.rel (0) target = $region13
  $region12: #{_style_mixer_forward.1} parent=0 // pred_region
    _
  $region13: #{_style_mixer_forward.1} parent=0 // pred_fallthru
    _
  // Predicated region
  $region14: #{_style_mixer_forward.1} parent=0 // pred_check
    _
  $region15: #{_style_mixer_forward.1} parent=0 // pred_check_branch
    %432 = sbr.rel (0) target = $region17
  $region16: #{_style_mixer_forward.1} parent=0 // pred_region
    _
  $region17: #{_style_mixer_forward.1} parent=0 // pred_fallthru
    _

</llo_original>
